<compile_context>
chip_gen: v6e
topology: v6e:2x2x1
jax: 0.10.0
libtpu: 0.0.40
codegen_flags: <defaults>
</compile_context>

<pallas_src>
import math

import jax
import jax.numpy as jnp
from jax.experimental import pallas as pl
from jax.experimental.pallas import tpu as pltpu

BN_EPS = 1e-5
_VMEM_STREAM_BUDGET = 12 * 1024 * 1024   # double-buffered streamed blocks, safe on v5e/v6e/v7x


def _round_down_128(v):
    return max(128, (v // 128) * 128)


# ----------------------------- Pallas kernel -----------------------------

def _pw_conv_bn_kernel(x_ref, w_ref, b_ref, o_ref):
    """Per-sample (Cout,Cin)@(Cin,TL) MXU matmul + `+ bias` epilogue, stored in out dtype.

    x_ref: (Nb, Cin, TL) activations in their HBM dtype (f32 or bf16); cast to bf16 in-register.
    w_ref: (Cout, Cin) bf16 weights with the BN scale already folded in.
    b_ref: (Cout, 1) f32 folded conv-bias + BN bias.
    o_ref: (Nb, Cout, TL) output (default bf16), lane-dense.
    """
    w = w_ref[...]
    b = b_ref[...]
    for n in range(x_ref.shape[0]):                                   # static unroll, Nb tiny
        acc = jnp.dot(w, x_ref[n].astype(jnp.bfloat16),               # MXU, f32 accumulate
                      preferred_element_type=jnp.float32)
        o_ref[n] = (acc + b).astype(o_ref.dtype)                      # f32 epilogue -> out dtype


# ----------------------------- wrapper -----------------------------

def pointwise_tcn(x, w_fold_bf16, bias_f32, *, stride=1, tile_l=2048, batch_block=None,
                  out_dtype=jnp.bfloat16):
    """x: (N, Cin, T, V) NCHW activations (f32 or bf16).
    w_fold_bf16: (Cout, Cin) bf16 weight with BN scale folded; bias_f32: (Cout, 1) f32.

    Returns (N, Cout, T_out, V) in `out_dtype`, T_out = ceil(T / stride), matching
    nn.Conv2d(kernel_size=1, stride=(stride, 1)) + eval-mode BatchNorm2d.
    """
    N, Cin, T, V = x.shape
    Cout = w_fold_bf16.shape[0]

    # TODO(synk): for stride > 1 the temporal subsample is one extra XLA slice pass; the common
    # stride == 1 case feeds the HBM activations straight into the kernel (no wrapper passes).
    xs = x[:, :, ::stride, :] if stride > 1 else x
    Tout = xs.shape[2]
    L = Tout * V
    xf = xs.reshape(N, Cin, L)                      # contiguous view, no copy

    # Lane tile: multiple of 128 (or the full lane extent).  The last, possibly partial, block is
    # handled by Pallas' masked stores -- no pad / slice passes over HBM.
    tile_l = _round_down_128(int(tile_l))
    TL = L if L <= tile_l else tile_l
    n_lane_tiles = pl.cdiv(L, TL)

    # When one sample is a single small lane tile, batch several samples per grid step, but keep
    # at least 2 grid steps so both TensorCores (v7x megacore) have work.
    if batch_block is None:
        if n_lane_tiles >= 2 or N == 1:
            batch_block = 1
        else:
            batch_block = min(N, max(1, 2048 // TL))
            while batch_block > 1 and pl.cdiv(N, batch_block) < 2:
                batch_block -= 1
    Nb = int(batch_block)

    # Cap the double-buffered streamed working set (input + output blocks) under budget.
    x_bytes = jnp.dtype(xf.dtype).itemsize
    o_bytes = jnp.dtype(out_dtype).itemsize

    def _stream_bytes(tl):
        return 2 * Nb * tl * (Cin * x_bytes + Cout * o_bytes)

    while TL > 128 and _stream_bytes(TL) > _VMEM_STREAM_BUDGET:
        TL = max(128, ((TL - 1) // 128) * 128)

    grid = (pl.cdiv(N, Nb), pl.cdiv(L, TL))
    out = pl.pallas_call(
        _pw_conv_bn_kernel,
        out_shape=jax.ShapeDtypeStruct((N, Cout, L), out_dtype),
        grid=grid,
        in_specs=[
            pl.BlockSpec((Nb, Cin, TL), lambda n, l: (n, 0, l)),   # streamed, double-buffered
            pl.BlockSpec((Cout, Cin), lambda n, l: (0, 0)),        # resident folded weights
            pl.BlockSpec((Cout, 1), lambda n, l: (0, 0)),          # resident folded bias
        ],
        out_specs=pl.BlockSpec((Nb, Cout, TL), lambda n, l: (n, 0, l)),  # lane-dense stores
        compiler_params=pltpu.CompilerParams(
            dimension_semantics=("parallel", "parallel"),           # megacore-friendly
        ),
    )(xf, w_fold_bf16, bias_f32)

    return out.reshape(N, Cout, Tout, V)


# ----------------------------- parameters -----------------------------

def make_pointwise_tcn_params(key, in_channels, out_channels, groups=1):
    """Synthetic PointWiseTCN parameters: Conv2d(1x1, bias=True) + BatchNorm2d running stats.

    Folding (done ONCE here, hoisted out of the per-call path):
        scale = gamma / sqrt(var + eps)
        W'    = scale[:, None] * W              (folded in f32, then cast to bf16)
        bias  = beta + (conv_bias - mean) * scale
    """
    k_w, k_b, k_g, k_be, k_m, k_v = jax.random.split(key, 6)
    cin_g = in_channels // groups
    bound = 1.0 / math.sqrt(cin_g)
    w_g = jax.random.uniform(k_w, (out_channels, cin_g), jnp.float32, -bound, bound)
    conv_b = jax.random.uniform(k_b, (out_channels,), jnp.float32, -bound, bound)

    if groups == 1:
        w = w_g
    else:
        # TODO(synk): grouped 1x1 conv realized as an equivalent dense block-diagonal weight
        # (exact result, wasted zero-FLOPs); a per-group kernel would avoid the zeros.
        og = out_channels // groups
        w = jax.scipy.linalg.block_diag(*[w_g[g * og:(g + 1) * og] for g in range(groups)])

    # TODO(synk): BatchNorm2d is applied in eval mode (running stats); training-mode batch
    # statistics would need a cross-row reduction pass and are not folded here.
    bn_gamma = 1.0 + 0.5 * jax.random.uniform(k_g, (out_channels,), jnp.float32, -1.0, 1.0)
    bn_beta = 0.1 * jax.random.normal(k_be, (out_channels,), jnp.float32)
    bn_mean = 0.1 * jax.random.normal(k_m, (out_channels,), jnp.float32)
    bn_var = 1.0 + 0.5 * jax.random.uniform(k_v, (out_channels,), jnp.float32, 0.0, 1.0)

    inv_std = 1.0 / jnp.sqrt(bn_var + BN_EPS)
    scale = bn_gamma * inv_std
    bias = bn_beta + (conv_b - bn_mean) * scale
    w_fold_bf16 = (w * scale[:, None]).astype(jnp.bfloat16)
    bias_f32 = bias.astype(jnp.float32).reshape(out_channels, 1)

    return {
        "w": w, "conv_b": conv_b,
        "bn_gamma": bn_gamma, "bn_beta": bn_beta, "bn_mean": bn_mean, "bn_var": bn_var,
        "w_fold_bf16": w_fold_bf16, "bias_f32": bias_f32,
    }


# ----------------------------- reference (pure JAX, mirrors kernel quantization) ----------------

def reference_pointwise_tcn(x, p, stride, out_dtype=jnp.bfloat16):
    xs = x[:, :, ::stride, :] if stride > 1 else x
    xb = xs.astype(jnp.bfloat16).astype(jnp.float32)                 # same bf16 quantization
    wf = p["w_fold_bf16"].astype(jnp.float32)
    y = jnp.einsum("oc,nctv->notv", wf, xb, precision=jax.lax.Precision.HIGHEST)
    y = y + p["bias_f32"].reshape(1, -1, 1, 1)
    return y.astype(out_dtype)


# ----------------------------- demo -----------------------------

if __name__ == "__main__":
    N, Cin, T, V = 2, 4, 16, 16            # NCHW input (H = time, W = joints)
    Cout, stride, groups = 64, 2, 1

    key = jax.random.PRNGKey(0)
    k_p, k_x = jax.random.split(key)
    params = make_pointwise_tcn_params(k_p, Cin, Cout, groups=groups)
    x = jax.random.normal(k_x, (N, Cin, T, V), jnp.float32)

    fwd = jax.jit(lambda inp: pointwise_tcn(inp, params["w_fold_bf16"], params["bias_f32"],
                                            stride=stride))
    out = fwd(x)
    jax.block_until_ready(out)

    assert out.shape == (N, Cout, T // stride, V), out.shape
    assert out.dtype == jnp.bfloat16, out.dtype
    out_f32 = out.astype(jnp.float32)
    assert bool(jnp.all(jnp.isfinite(out_f32)))

    ref = reference_pointwise_tcn(x, params, stride).astype(jnp.float32)
    assert bool(jnp.allclose(out_f32, ref, rtol=1e-2, atol=1e-2)), \
        float(jnp.max(jnp.abs(out_f32 - ref)))

    print("KERNEL_OK")
</pallas_src>

<mosaic_0001>
module attributes {stable_mosaic.version = 11 : i64} {
  func.func @_pw_conv_bn_kernel(%arg0: i32, %arg1: i32, %arg2: memref<1x4x128xf32, #tpu.memory_space<vmem>>, %arg3: memref<64x4xbf16, #tpu.memory_space<vmem>>, %arg4: memref<64x1xf32, #tpu.memory_space<vmem>>, %arg5: memref<1x64x128xbf16, #tpu.memory_space<vmem>>) attributes {dimension_semantics = [#tpu.dimension_semantics<parallel>, #tpu.dimension_semantics<parallel>], iteration_bounds = array<i64: 2, 1>, scalar_prefetch = 0 : i64, scratch_operands = 0 : i64, tpu.core_type = #tpu.core_type<tc>, window_params = [{transform_indices = @transform_0, window_bounds = array<i64: 1, 4, 128>}, {pipeline_mode = #tpu.pipeline_mode<synchronous>, transform_indices = @transform_1, window_bounds = array<i64: 64, 4>}, {pipeline_mode = #tpu.pipeline_mode<synchronous>, transform_indices = @transform_2, window_bounds = array<i64: 64, 1>}, {transform_indices = @transform_3, window_bounds = array<i64: 1, 64, 128>}]} {
    %c0 = arith.constant 0 : index
    %c0_0 = arith.constant 0 : index
    %0 = vector.load %arg3[%c0, %c0_0] : memref<64x4xbf16, #tpu.memory_space<vmem>>, vector<64x4xbf16>
    %c0_1 = arith.constant 0 : index
    %c0_2 = arith.constant 0 : index
    %1 = vector.load %arg4[%c0_1, %c0_2] : memref<64x1xf32, #tpu.memory_space<vmem>>, vector<64x1xf32>
    %c0_3 = arith.constant 0 : index
    %c0_4 = arith.constant 0 : index
    %c0_5 = arith.constant 0 : index
    %2 = vector.load %arg2[%c0_3, %c0_4, %c0_5] : memref<1x4x128xf32, #tpu.memory_space<vmem>>, vector<1x4x128xf32>
    %3 = vector.shape_cast %2 : vector<1x4x128xf32> to vector<4x128xf32>
    %4 = arith.truncf %3 : vector<4x128xf32> to vector<4x128xbf16>
    %cst = arith.constant dense<0.000000e+00> : vector<64x128xf32>
    %5 = tpu.matmul %0, %4, %cst {dimension_numbers = #tpu.dot_dimension_numbers<[1], [0], [0], [1], [0, 0, 1, 1], [], []>} : vector<64x4xbf16>, vector<4x128xbf16>, vector<64x128xf32> -> vector<64x128xf32>
    %6 = vector.broadcast %1 : vector<64x1xf32> to vector<64x128xf32>
    %7 = arith.addf %5, %6 : vector<64x128xf32>
    %8 = arith.truncf %7 : vector<64x128xf32> to vector<64x128xbf16>
    %c0_6 = arith.constant 0 : index
    %c0_7 = arith.constant 0 : index
    %c0_8 = arith.constant 0 : index
    %9 = vector.load %arg5[%c0_6, %c0_7, %c0_8] : memref<1x64x128xbf16, #tpu.memory_space<vmem>>, vector<1x64x128xbf16>
    %10 = vector.shape_cast %9 : vector<1x64x128xbf16> to vector<64x128xbf16>
    %11 = vector.shape_cast %8 : vector<64x128xbf16> to vector<1x64x128xbf16>
    tpu.vector_store %arg5[%c0_6, %c0_7, %c0_8], %11 {strides = array<i32>} : memref<1x64x128xbf16, #tpu.memory_space<vmem>>, vector<1x64x128xbf16>,
    return
  }
  func.func @transform_0(%arg0: i32, %arg1: i32) -> (i32, i32, i32) {
    %c0_i32 = arith.constant 0 : i32
    %c0_i32_0 = arith.constant 0 : i32
    return %arg0, %c0_i32, %arg1 : i32, i32, i32
  }
  func.func @transform_1(%arg0: i32, %arg1: i32) -> (i32, i32) {
    %c0_i32 = arith.constant 0 : i32
    %c0_i32_0 = arith.constant 0 : i32
    %c0_i32_1 = arith.constant 0 : i32
    return %c0_i32, %c0_i32_0 : i32, i32
  }
  func.func @transform_2(%arg0: i32, %arg1: i32) -> (i32, i32) {
    %c0_i32 = arith.constant 0 : i32
    %c0_i32_0 = arith.constant 0 : i32
    %c0_i32_1 = arith.constant 0 : i32
    return %c0_i32, %c0_i32_0 : i32, i32
  }
  func.func @transform_3(%arg0: i32, %arg1: i32) -> (i32, i32, i32) {
    %c0_i32 = arith.constant 0 : i32
    %c0_i32_0 = arith.constant 0 : i32
    return %arg0, %c0_i32, %arg1 : i32, i32, i32
  }
}

</mosaic_0001>

<llo_original>
// kernel: _lambda_.1
$region0: #{_lambda_.1}
  #allocation0 [shape = 'u32[]', space=smem, size = 0x4, offset = 0x4, fixed_abs, tag = 'smem constant byte address 0x4 - core index']
  #allocation1 [shape = 'u32[144,128]{1,0:T(1,128)}', space=vmem, size = 0x12000, scoped, tag = 'internal scratch']
  %s0 = inlined_call_operand.vmem [shape: f32[2,4,128], index: 0, kind: input, shape index: {}]
  %s1 = inlined_call_operand.vmem [shape: bf16[64,4], index: 1, kind: input, shape index: {}]
  %s2 = inlined_call_operand.vmem [shape: f32[64,1], index: 2, kind: input, shape index: {}]
  %s3 = inlined_call_operand.vmem [shape: bf16[2,64,128], index: 3, kind: output, shape index: {}]
  %s4 = sld [smem:[#allocation0]]
  $region45: #{_lambda_.1} parent=0
    _
  %s6 = ssub.s32 1, %s4
  %s7 = scalar_select 0, %s6, %s4
  loop: start=0, step=1, limit=4
  $region2: #{_lambda_.1} parent=0 // loop_pre_header
    _
  $region3: #{_lambda_.1} parent=0 // loop_header
    %s9 = sphi 0, %s13
    %p10 = scmp.ge.s32.totalorder %s9, 4
    %s16 = sphi 0, %s28
    %s17 = sphi 0, %s24
    %s18 = sphi 0, %s16
    %s19 = sphi 0, %s17
    %s20 = sphi 0, %s18
    %s21 = sphi 0, %s19
    %s33 = sphi 0, %s35
    %s36 = sphi 0, %s33
    %s37 = sphi 0, %s36
    %s53 = sphi 0, %s37
    %s57 = sphi 0, %s57
    %s59 = sphi 0, %s57
    %s60 = sphi 0, %s59
    %s74 = sphi 0, %s60
    %s78 = sphi 0, %s78
    %s80 = sphi 0, %s78
    %s81 = sphi 0, %s80
    %s95 = sphi 0, %s81
    %s103 = sphi 0, %s105
    %s106 = sphi 0, %s103
    %s107 = sphi 0, %s106
    %s123 = sphi 0, %s107
  $region4: #{_lambda_.1} parent=0 // loop_header_branch
    %12 = sbr.rel (%p10) target = $region8
  $region5: #{_lambda_.1} parent=0 // loop_body
    %s14 = ssub.s32 %s9, 1
    %s15 = ssub.s32 %s9, 2
    %s22 = sadd.s32 1, %s17
    %p23 = scmp.ge.s32.totalorder %s22, 1
    %s24 = scalar_select %p23, 0, %s22
    %s25 = sadd.s32 1, %s16
    %s26 = scalar_select %p23, %s25, %s16
    %p27 = scmp.ge.s32.totalorder %s26, 2
    %s28 = scalar_select %p27, 0, %s26
    %s29 = ssub.s32 %s16, %s28
    %s30 = ssub.s32 %s17, %s24
    %s31 = sor.u32 %s29, %s30
    %p32 = scmp.eq.s32.totalorder %s31, 0
    %s34 = sadd.s32 %s33, 1
    %s35 = scalar_select %p32, %s33, %s34
    %p38 = pneg %p32
    %p39 = scmp.eq.s32.totalorder %s9, 1
    %p40 = por %p38, %p39
    %p41 = scmp.ne.s32.totalorder %s33, %s36
    %p42 = scmp.eq.s32.totalorder %s9, 0
    %p43 = por %p41, %p42
    %p44 = scmp.ne.s32.totalorder %s33, %s36
    %p45 = scmp.eq.s32.totalorder %s14, 1
    %p46 = por %p44, %p45
    %p47 = scmp.ne.s32.totalorder %s36, %s37
    %p48 = scmp.eq.s32.totalorder %s14, 0
    %p49 = por %p47, %p48
    %p50 = scmp.ne.s32.totalorder %s36, %s37
    %p51 = scmp.eq.s32.totalorder %s15, 1
    %p52 = por %p50, %p51
    %p54 = scmp.ne.s32.totalorder %s37, %s53
    %p55 = scmp.eq.s32.totalorder %s15, 0
    %p56 = por %p54, %p55
    %s58 = sadd.s32 %s57, 1
    %p61 = scmp.eq.s32.totalorder %s9, 1
    %p62 = scmp.ne.s32.totalorder %s57, %s59
    %p63 = scmp.eq.s32.totalorder %s9, 0
    %p64 = por %p62, %p63
    %p65 = scmp.ne.s32.totalorder %s57, %s59
    %p66 = scmp.eq.s32.totalorder %s14, 1
    %p67 = por %p65, %p66
    %p68 = scmp.ne.s32.totalorder %s59, %s60
    %p69 = scmp.eq.s32.totalorder %s14, 0
    %p70 = por %p68, %p69
    %p71 = scmp.ne.s32.totalorder %s59, %s60
    %p72 = scmp.eq.s32.totalorder %s15, 1
    %p73 = por %p71, %p72
    %p75 = scmp.ne.s32.totalorder %s60, %s74
    %p76 = scmp.eq.s32.totalorder %s15, 0
    %p77 = por %p75, %p76
    %s79 = sadd.s32 %s78, 1
    %p82 = scmp.eq.s32.totalorder %s9, 1
    %p83 = scmp.ne.s32.totalorder %s78, %s80
    %p84 = scmp.eq.s32.totalorder %s9, 0
    %p85 = por %p83, %p84
    %p86 = scmp.ne.s32.totalorder %s78, %s80
    %p87 = scmp.eq.s32.totalorder %s14, 1
    %p88 = por %p86, %p87
    %p89 = scmp.ne.s32.totalorder %s80, %s81
    %p90 = scmp.eq.s32.totalorder %s14, 0
    %p91 = por %p89, %p90
    %p92 = scmp.ne.s32.totalorder %s80, %s81
    %p93 = scmp.eq.s32.totalorder %s15, 1
    %p94 = por %p92, %p93
    %p96 = scmp.ne.s32.totalorder %s81, %s95
    %p97 = scmp.eq.s32.totalorder %s15, 0
    %p98 = por %p96, %p97
    %s99 = ssub.s32 %s16, %s28
    %s100 = ssub.s32 %s17, %s24
    %s101 = sor.u32 %s99, %s100
    %p102 = scmp.eq.s32.totalorder %s101, 0
    %s104 = sadd.s32 %s103, 1
    %s105 = scalar_select %p102, %s103, %s104
    %p108 = pneg %p102
    %p109 = scmp.eq.s32.totalorder %s9, 1
    %p110 = por %p108, %p109
    %p111 = scmp.ne.s32.totalorder %s103, %s106
    %p112 = scmp.eq.s32.totalorder %s9, 0
    %p113 = por %p111, %p112
    %p114 = scmp.ne.s32.totalorder %s103, %s106
    %p115 = scmp.eq.s32.totalorder %s14, 1
    %p116 = por %p114, %p115
    %p117 = scmp.ne.s32.totalorder %s106, %s107
    %p118 = scmp.eq.s32.totalorder %s14, 0
    %p119 = por %p117, %p118
    %p120 = scmp.ne.s32.totalorder %s106, %s107
    %p121 = scmp.eq.s32.totalorder %s15, 1
    %p122 = por %p120, %p121
    %p124 = scmp.ne.s32.totalorder %s107, %s123
    %p125 = scmp.eq.s32.totalorder %s15, 0
    %p126 = por %p124, %p125
    %p127 = scmp.le.s32.totalorder 1, %s9
    %p128 = scmp.lt.s32.totalorder %s9, 3
    %p129 = pnand %p127, %p128
    %p130 = pneg %p129
    // Predicated region
    $region9: #{_lambda_.1} parent=5 // pred_check
      _
    $region10: #{_lambda_.1} parent=5 // pred_check_branch
      %132 = sbr.rel (%p129) target = $region12
    $region11: #{_lambda_.1} parent=5 // pred_region
      %s133 = ssub.s32 %s9, 1
      // Predicated region
      $region13: #{_lambda_.1} parent=11 // pred_check
        %p134 = pneg %p70
      $region14: #{_lambda_.1} parent=11 // pred_check_branch
        %136 = sbr.rel (%p134) target = $region16
      $region15: #{_lambda_.1} parent=11 // pred_region
        _
      $region16: #{_lambda_.1} parent=11 // pred_fallthru
        _
      // Predicated region
      $region17: #{_lambda_.1} parent=11 // pred_check
        %p137 = pneg %p91
      $region18: #{_lambda_.1} parent=11 // pred_check_branch
        %139 = sbr.rel (%p137) target = $region20
      $region19: #{_lambda_.1} parent=11 // pred_region
        _
      $region20: #{_lambda_.1} parent=11 // pred_fallthru
        _
    $region12: #{_lambda_.1} parent=5 // pred_fallthru
      _
    %p140 = scmp.lt.s32.totalorder %s9, 2
    // Predicated region
    $region21: #{_lambda_.1} parent=5 // pred_check
      %p141 = pneg %p140
    $region22: #{_lambda_.1} parent=5 // pred_check_branch
      %143 = sbr.rel (%p141) target = $region24
    $region23: #{_lambda_.1} parent=5 // pred_region
      // Predicated region
      $region25: #{_lambda_.1} parent=23 // pred_check
        %p144 = pneg %p43
      $region26: #{_lambda_.1} parent=23 // pred_check_branch
        %146 = sbr.rel (%p144) target = $region28
      $region27: #{_lambda_.1} parent=23 // pred_region
        %p147 = scmp.lt.s32.totalorder %s16, 1
        %s148 = scalar_select %p147, %s16, 1
        %p149 = scmp.lt.s32.totalorder %s17, 0
        %s150 = scalar_select %p149, %s17, 0
        %s151 = sadd.s32 %s150, %s148
        %s152 = smul.addr %s151, 4
        %s153 = scalar_lea.vmem %s0, %s152
      $region28: #{_lambda_.1} parent=23 // pred_fallthru
        _
    $region24: #{_lambda_.1} parent=5 // pred_fallthru
      _
    %p154 = scmp.le.s32.totalorder 1, %s9
    %p155 = scmp.lt.s32.totalorder %s9, 3
    %p156 = pnand %p154, %p155
    %p157 = pneg %p156
    // Predicated region
    $region29: #{_lambda_.1} parent=5 // pred_check
      _
    $region30: #{_lambda_.1} parent=5 // pred_check_branch
      %159 = sbr.rel (%p156) target = $region32
    $region31: #{_lambda_.1} parent=5 // pred_region
      %s160 = ssub.s32 %s9, 1
      %p161 = scmp.lt.s32.totalorder %s18, 1
      %s162 = scalar_select %p161, %s18, 1
      %p163 = scmp.lt.s32.totalorder %s19, 0
      %s164 = scalar_select %p163, %s19, 0
      %s165 = sadd.s32 %s164, %s162
      %s166 = smul.addr %s165, 4
      %s167 = scalar_lea.vmem %s0, %s166
      %p168 = pneg %p49
      %p169 = pneg %p46
      %p170 = pneg %p70
      %p171 = pneg %p67
      %p172 = pneg %p91
      %p173 = pneg %p88
      %p174 = pneg %p119
      %p175 = pneg %p116
      %p176 = scmp.lt.s32.totalorder %s18, 1
      %s177 = scalar_select %p176, %s18, 1
      %p178 = scmp.lt.s32.totalorder %s19, 0
      %s179 = scalar_select %p178, %s19, 0
      %s180 = smul.addr %s177, 8
      %s181 = sadd.s32 %s179, %s180
      %s182 = smul.addr %s181, 4
      %s183 = scalar_lea.vmem %s3, %s182
      %p184 = scmp.lt.s32.totalorder %s18, 1
      %s185 = scalar_select %p184, %s18, 1
      %p186 = scmp.lt.s32.totalorder %s19, 0
      %s187 = scalar_select %p186, %s19, 0
      %s188 = sadd.s32 %s187, %s185
      %s189 = smul.addr %s188, 4
      %s190 = scalar_lea.vmem %s0, %s189
      %p191 = scmp.lt.s32.totalorder %s18, 1
      %s192 = scalar_select %p191, %s18, 1
      %p193 = scmp.lt.s32.totalorder %s19, 0
      %s194 = scalar_select %p193, %s19, 0
      %s195 = smul.addr %s192, 8
      %s196 = sadd.s32 %s194, %s195
      %s197 = smul.addr %s196, 4
      %s198 = scalar_lea.vmem %s3, %s197
      %v200 = vld [vmem:[%s1] sm:$0xf]
      %v201 = vld [vmem:[%s1 + $0x4] sm:$0xf]
      %v202 = vld [vmem:[%s1 + $0x8] sm:$0xf]
      %v203 = vld [vmem:[%s1 + $0xc] sm:$0xf]
      %v204 = vld [vmem:[%s1 + $0x10] sm:$0xf]
      %v205 = vld [vmem:[%s1 + $0x14] sm:$0xf]
      %v206 = vld [vmem:[%s1 + $0x18] sm:$0xf]
      %v207 = vld [vmem:[%s1 + $0x1c] sm:$0xf]
      %v208 = vld [vmem:[%s2] sm:$0xff]
      %v209 = vld [vmem:[%s2 + $0x8] sm:$0xff]
      %v210 = vld [vmem:[%s2 + $0x10] sm:$0xff]
      %v211 = vld [vmem:[%s2 + $0x18] sm:$0xff]
      %v212 = vld [vmem:[%s2 + $0x20] sm:$0xff]
      %v213 = vld [vmem:[%s2 + $0x28] sm:$0xff]
      %v214 = vld [vmem:[%s2 + $0x30] sm:$0xff]
      %v215 = vld [vmem:[%s2 + $0x38] sm:$0xff]
      %v216 = vld [vmem:[%s190] sm:$0xf]
      %v217 = vpack.c.bf16 %v216, %v216
      %219 = vset.pattern.permute.xlu0 0
      %220 = vperm.xlu0 %219, %v208
      %v221 = vpop.permute.xlu0 %220
      %224 = vset.pattern.permute.xlu0 0
      %225 = vperm.xlu0 %224, %v209
      %v226 = vpop.permute.xlu0 %225
      %229 = vset.pattern.permute.xlu0 0
      %230 = vperm.xlu0 %229, %v210
      %v231 = vpop.permute.xlu0 %230
      %234 = vset.pattern.permute.xlu0 0
      %235 = vperm.xlu0 %234, %v211
      %v236 = vpop.permute.xlu0 %235
      %239 = vset.pattern.permute.xlu0 0
      %240 = vperm.xlu0 %239, %v212
      %v241 = vpop.permute.xlu0 %240
      %244 = vset.pattern.permute.xlu0 0
      %245 = vperm.xlu0 %244, %v213
      %v246 = vpop.permute.xlu0 %245
      %249 = vset.pattern.permute.xlu0 0
      %250 = vperm.xlu0 %249, %v214
      %v251 = vpop.permute.xlu0 %250
      %254 = vset.pattern.permute.xlu0 0
      %255 = vperm.xlu0 %254, %v215
      %v256 = vpop.permute.xlu0 %255
      %v266 = vunpack.c.l.b16 %v200
      %v267 = vunpack.c.l.b16 %v201
      %v268 = vunpack.c.l.b16 %v202
      %v269 = vunpack.c.l.b16 %v203
      %v270 = vunpack.c.l.b16 %v204
      %v271 = vunpack.c.l.b16 %v205
      %v272 = vunpack.c.l.b16 %v206
      %v273 = vunpack.c.l.b16 %v207
      %v274 = vpack.c.b16 %v267, %v266
      %v275 = vpack.c.b16 %v269, %v268
      %v276 = vpack.c.b16 %v271, %v270
      %v277 = vpack.c.b16 %v273, %v272
      %vm278 = vcmask 31744
      %v280 = vsel %vm278, %v274, 0
      %v283 = vsel %vm278, %v275, 0
      %v286 = vsel %vm278, %v276, 0
      %v289 = vsel %vm278, %v277, 0
      %vm291 = vcmask 1041408
      %v293 = vsel %vm291, %v217, 0
      %295 = vmatprep.subr.bf16.mxu0 0
      %296 = vmatpush1.bf16.msra.mxu0 0
      %297 = vmatprep.subr.bf16.mxu0 0
      %298 = vmatpush1.bf16.msra.mxu0 0
      %299 = vmatprep.subr.bf16.mxu0 0
      %300 = vmatpush1.bf16.msra.mxu0 0
      %301 = vmatprep.subr.bf16.mxu0 0
      %302 = vmatpush1.bf16.msra.mxu0 0
      %303 = vmatprep.subr.bf16.mxu0 0
      %304 = vmatpush1.bf16.msra.mxu0 0
      %305 = vmatprep.subr.bf16.mxu0 0
      %306 = vmatpush1.bf16.msra.mxu0 0
      %307 = vmatprep.subr.bf16.mxu0 0
      %308 = vmatpush1.bf16.msra.mxu0 0
      %309 = vmatprep.subr.bf16.mxu0 0
      %310 = vmatpush1.bf16.msra.mxu0 %v293
      %311 = vmatprep.subr.bf16.mxu0 0
      %312 = vmatpush2.bf16.msra.mxu0 0
      %313 = vmatprep.subr.bf16.mxu0 0
      %314 = vmatpush2.bf16.msra.mxu0 0
      %315 = vmatprep.subr.bf16.mxu0 0
      %316 = vmatpush2.bf16.msra.mxu0 0
      %317 = vmatprep.subr.bf16.mxu0 0
      %318 = vmatpush2.bf16.msra.mxu0 0
      %319 = vmatprep.subr.bf16.mxu0 0
      %320 = vmatpush2.bf16.msra.mxu0 0
      %321 = vmatprep.subr.bf16.mxu0 0
      %322 = vmatpush2.bf16.msra.mxu0 0
      %323 = vmatprep.subr.bf16.mxu0 0
      %324 = vmatpush2.bf16.msra.mxu0 0
      %325 = vmatprep.subr.bf16.mxu0 0
      %326 = vmatpush2.bf16.msra.mxu0 0
      %327 = vmatprep.mubr.bf16.mxu0 0
      %328 = vmatmul.mubr.bf16.gmra.mxu0 %v280
      %v329 = vpop.f32.mrf.mxu0
      %v330 = vadd.f32 %v221, %v329
      %v331 = vpop.f32.mrf.mxu0
      %v332 = vpop.f32.mrf.mxu0
      %v333 = vadd.f32 %v226, %v332
      %v334 = vpop.f32.mrf.mxu0
      %335 = vmatprep.mubr.bf16.mxu0 0
      %336 = vmatmul.mubr.bf16.gmra.mxu0 %v283
      %v337 = vpop.f32.mrf.mxu0
      %v338 = vadd.f32 %v231, %v337
      %v339 = vpop.f32.mrf.mxu0
      %v340 = vpop.f32.mrf.mxu0
      %v341 = vadd.f32 %v236, %v340
      %v342 = vpop.f32.mrf.mxu0
      %343 = vmatprep.mubr.bf16.mxu0 0
      %344 = vmatmul.mubr.bf16.gmra.mxu0 %v286
      %v345 = vpop.f32.mrf.mxu0
      %v346 = vadd.f32 %v241, %v345
      %v347 = vpop.f32.mrf.mxu0
      %v348 = vpop.f32.mrf.mxu0
      %v349 = vadd.f32 %v246, %v348
      %v350 = vpop.f32.mrf.mxu0
      %351 = vmatprep.mubr.bf16.mxu0 0
      %352 = vmatmul.mubr.bf16.gmra.mxu0 %v289
      %v353 = vpop.f32.mrf.mxu0
      %v354 = vadd.f32 %v251, %v353
      %v355 = vpop.f32.mrf.mxu0
      %v356 = vpop.f32.mrf.mxu0
      %v357 = vadd.f32 %v256, %v356
      %v358 = vpop.f32.mrf.mxu0
      %359 = vdwg.mxu0
      %v360 = vpack.c.bf16 %v333, %v330
      %v361 = vpack.c.bf16 %v341, %v338
      %v362 = vpack.c.bf16 %v349, %v346
      %v363 = vpack.c.bf16 %v357, %v354
      %v368 = vunpack.c.l.b16 %v360
      %v369 = vunpack.c.h.b16 %v360
      %v370 = vunpack.c.l.b16 %v361
      %v371 = vunpack.c.h.b16 %v361
      %v372 = vunpack.c.l.b16 %v362
      %v373 = vunpack.c.h.b16 %v362
      %v374 = vunpack.c.l.b16 %v363
      %v375 = vunpack.c.h.b16 %v363
      %v376 = vpack.c.b16 %v368, %v368
      %v377 = vpack.c.b16 %v369, %v369
      %v378 = vpack.c.b16 %v370, %v370
      %v379 = vpack.c.b16 %v371, %v371
      %v380 = vpack.c.b16 %v372, %v372
      %v381 = vpack.c.b16 %v373, %v373
      %v382 = vpack.c.b16 %v374, %v374
      %v383 = vpack.c.b16 %v375, %v375
      %392 = vst [vmem:[%s198] sm:$0xf] %v376
      %393 = vst [vmem:[%s198 + $0x4] sm:$0xf] %v377
      %394 = vst [vmem:[%s198 + $0x8] sm:$0xf] %v378
      %395 = vst [vmem:[%s198 + $0xc] sm:$0xf] %v379
      %396 = vst [vmem:[%s198 + $0x10] sm:$0xf] %v380
      %397 = vst [vmem:[%s198 + $0x14] sm:$0xf] %v381
      %398 = vst [vmem:[%s198 + $0x18] sm:$0xf] %v382
      %399 = vst [vmem:[%s198 + $0x1c] sm:$0xf] %v383
      %p400 = scmp.lt.s32.totalorder %s18, 1
      %s401 = scalar_select %p400, %s18, 1
      %p402 = scmp.lt.s32.totalorder %s19, 0
      %s403 = scalar_select %p402, %s19, 0
      %s404 = smul.addr %s401, 8
      %s405 = sadd.s32 %s403, %s404
      %s406 = smul.addr %s405, 4
      %s407 = scalar_lea.vmem %s3, %s406
      // Predicated region
      $region33: #{_lambda_.1} parent=31 // pred_check
        %p408 = pneg %p116
      $region34: #{_lambda_.1} parent=31 // pred_check_branch
        %410 = sbr.rel (%p408) target = $region36
      $region35: #{_lambda_.1} parent=31 // pred_region
        _
      $region36: #{_lambda_.1} parent=31 // pred_fallthru
        _
    $region32: #{_lambda_.1} parent=5 // pred_fallthru
      _
    %p411 = scmp.le.s32.totalorder 2, %s9
    // Predicated region
    $region37: #{_lambda_.1} parent=5 // pred_check
      %p412 = pneg %p411
    $region38: #{_lambda_.1} parent=5 // pred_check_branch
      %414 = sbr.rel (%p412) target = $region40
    $region39: #{_lambda_.1} parent=5 // pred_region
      %s415 = ssub.s32 %s9, 2
      // Predicated region
      $region41: #{_lambda_.1} parent=39 // pred_check
        %p416 = pneg %p122
      $region42: #{_lambda_.1} parent=39 // pred_check_branch
        %418 = sbr.rel (%p416) target = $region44
      $region43: #{_lambda_.1} parent=39 // pred_region
        %p419 = scmp.lt.s32.totalorder %s20, 1
        %s420 = scalar_select %p419, %s20, 1
        %p421 = scmp.lt.s32.totalorder %s21, 0
        %s422 = scalar_select %p421, %s21, 0
        %s423 = smul.addr %s420, 8
        %s424 = sadd.s32 %s422, %s423
        %s425 = smul.addr %s424, 4
        %s426 = scalar_lea.vmem %s3, %s425
      $region44: #{_lambda_.1} parent=39 // pred_fallthru
        _
    $region40: #{_lambda_.1} parent=5 // pred_fallthru
      _
  $region6: #{_lambda_.1} parent=0 // loop_footer
    %s13 = sadd.s32 1, %s9
  $region7: #{_lambda_.1} parent=0 // loop_footer_branch
    %8 = sbr.rel target = $region3
  $region8: #{_lambda_.1} parent=0 // loop_exit
    _

</llo_original>
